<compile_context>
chip_gen: v7x
topology: tpu7x:2x2x1
jax: 0.10.0
libtpu: 0.0.40
codegen_flags: <defaults>
</compile_context>

<pallas_src>
import functools

import jax
import jax.numpy as jnp
from jax.experimental import pallas as pl
from jax.experimental.pallas import tpu as pltpu

EPS = 1e-5


def _round_up(x, m):
    return (x + m - 1) // m * m


def _conv_bn_kernel(x_ref, w_ref, gamma_ref, beta_ref, o_ref, acc_ref, *, inv_m):
    # x_ref:     (M_pad, tk)   bf16 gated activations (Cin tile k)
    # w_ref:     (tk, tn)      bf16 1x1-conv weight tile (Cin tile k, Cout tile j)
    # gamma_ref: (1, tn)       f32 BN weight tile
    # beta_ref:  (1, tn)       f32 BN bias tile
    # o_ref:     (M_pad, tn)   f32 output tile (Cout tile j)
    # acc_ref:   (M_pad, tn)   f32 accumulator scratch
    k = pl.program_id(1)

    @pl.when(k == 0)
    def _():
        acc_ref[...] = jnp.zeros_like(acc_ref)

    acc_ref[...] += jnp.dot(
        x_ref[...], w_ref[...], preferred_element_type=jnp.float32
    )

    @pl.when(k == pl.num_programs(1) - 1)
    def _():
        y = acc_ref[...]
        # Single-pass BN stats: padded rows are exactly zero, so dividing by
        # the *real* row count M gives the exact per-channel mean / E[y^2].
        col_sum = jnp.sum(y, axis=0, keepdims=True)          # (1, tn)
        col_sumsq = jnp.sum(y * y, axis=0, keepdims=True)    # (1, tn)
        mean = col_sum * inv_m
        var = jnp.maximum(col_sumsq * inv_m - mean * mean, 0.0)
        scale = jax.lax.rsqrt(var + EPS) * gamma_ref[...]
        shift = beta_ref[...] - mean * scale
        o_ref[...] = (y * scale + shift).astype(o_ref.dtype)


def fused_sigmoid_mul_conv_bn(x383, x387, w, gamma, beta, *, tn=512, tk=512):
    """x383: (N, Cin, H, W), x387: (N, Cin, 1, 1), w: (Cout, Cin) 1x1 conv weight."""
    N, Cin, H, W = x383.shape
    Cout = w.shape[0]
    M = N * H * W

    # Tile sizes: lane-full multiples of 128, clipped to the (padded) problem.
    tn = max(128, min(tn, _round_up(Cout, 128)))
    tk = max(128, min(tk, _round_up(Cin, 128)))
    M_pad = _round_up(M, 8)
    Cin_pad = _round_up(Cin, tk)
    Cout_pad = _round_up(Cout, tn)

    # Gate + NCHW->(M, Cin) + bf16 cast (XLA fuses these into one pass).
    gated = jax.nn.sigmoid(x387) * x383                                  # (N,Cin,H,W)
    gated = jnp.transpose(gated, (0, 2, 3, 1)).reshape(M, Cin)
    gated = gated.astype(jnp.bfloat16)
    gated = jnp.pad(gated, ((0, M_pad - M), (0, Cin_pad - Cin)))

    wt = jnp.transpose(w, (1, 0)).astype(jnp.bfloat16)                   # (Cin, Cout)
    wt = jnp.pad(wt, ((0, Cin_pad - Cin), (0, Cout_pad - Cout)))

    gamma_p = jnp.pad(gamma.astype(jnp.float32), (0, Cout_pad - Cout)).reshape(1, Cout_pad)
    beta_p = jnp.pad(beta.astype(jnp.float32), (0, Cout_pad - Cout)).reshape(1, Cout_pad)

    grid = (Cout_pad // tn, Cin_pad // tk)   # (j: Cout tiles, k: Cin reduction tiles)

    kernel = functools.partial(_conv_bn_kernel, inv_m=1.0 / float(M))

    out_padded = pl.pallas_call(
        kernel,
        out_shape=jax.ShapeDtypeStruct((M_pad, Cout_pad), x383.dtype),
        grid_spec=pltpu.PrefetchScalarGridSpec(
            num_scalar_prefetch=0,
            grid=grid,
            in_specs=[
                pl.BlockSpec((M_pad, tk), lambda j, k: (0, k)),   # gated activations
                pl.BlockSpec((tk, tn), lambda j, k: (k, j)),      # weight tile
                pl.BlockSpec((1, tn), lambda j, k: (0, j)),       # gamma
                pl.BlockSpec((1, tn), lambda j, k: (0, j)),       # beta
            ],
            out_specs=pl.BlockSpec((M_pad, tn), lambda j, k: (0, j)),
            scratch_shapes=[pltpu.VMEM((M_pad, tn), jnp.float32)],
        ),
        compiler_params=pltpu.CompilerParams(
            dimension_semantics=("parallel", "arbitrary"),
        ),
        cost_estimate=pl.CostEstimate(
            flops=2 * M_pad * Cin_pad * Cout_pad,
            transcendentals=0,
            bytes_accessed=(
                M_pad * Cin_pad * 2            # gated (bf16)
                + Cin_pad * Cout_pad * 2       # weight (bf16)
                + M_pad * Cout_pad * 4         # output (f32)
            ),
        ),
    )(gated, wt, gamma_p, beta_p)

    out = out_padded[:M, :Cout].reshape(N, H, W, Cout)
    return jnp.transpose(out, (0, 3, 1, 2))                              # -> NCHW


def reference(x383, x387, w, gamma, beta):
    gated = jax.nn.sigmoid(x387) * x383                                  # (N, C, H, W)
    y = jnp.einsum("nchw,dc->ndhw", gated, w,
                   precision=jax.lax.Precision.HIGHEST)                  # 1x1 conv, no bias
    mean = jnp.mean(y, axis=(0, 2, 3), keepdims=True)
    var = jnp.mean((y - mean) ** 2, axis=(0, 2, 3), keepdims=True)
    return (y - mean) / jnp.sqrt(var + EPS) * gamma.reshape(1, -1, 1, 1) \
        + beta.reshape(1, -1, 1, 1)


if __name__ == "__main__":
    # Small shapes consistent with the module (orig: N=1, C=2904, H=W=14).
    # C=192 / tn=tk=128 exercises a real (2, 2) grid with channel padding,
    # and M = 2*7*7 = 98 exercises sublane padding (-> 104).
    N, C, H, W = 2, 192, 7, 7

    key = jax.random.PRNGKey(0)
    k1, k2, k3 = jax.random.split(key, 3)
    x383 = jax.random.normal(k1, (N, C, H, W), dtype=jnp.float32)
    x387 = jax.random.normal(k2, (N, C, 1, 1), dtype=jnp.float32)
    # Deterministic parameter init (Conv2d weight; BN affine defaults: gamma=1, beta=0).
    w = jax.random.normal(k3, (C, C), dtype=jnp.float32) * (1.0 / jnp.sqrt(C))
    gamma = jnp.ones((C,), dtype=jnp.float32)
    beta = jnp.zeros((C,), dtype=jnp.float32)

    out = fused_sigmoid_mul_conv_bn(x383, x387, w, gamma, beta, tn=128, tk=128)
    out = jax.block_until_ready(out)

    ref = reference(x383, x387, w, gamma, beta)
    assert out.shape == (N, C, H, W)
    # Tolerance loosened vs. pure-f32 because matmul operands are bf16
    # (BN re-normalization absorbs most of the quantization error).
    max_err = float(jnp.max(jnp.abs(out - ref)))
    assert jnp.allclose(out, ref, atol=5e-2, rtol=5e-2), max_err

    print("KERNEL_OK")
</pallas_src>

<mosaic_0001>
module attributes {stable_mosaic.version = 11 : i64} {
  func.func @_conv_bn_kernel(%arg0: i32, %arg1: i32, %arg2: memref<104x128xbf16, #tpu.memory_space<vmem>>, %arg3: memref<128x128xbf16, #tpu.memory_space<vmem>>, %arg4: memref<1x128xf32, #tpu.memory_space<vmem>>, %arg5: memref<1x128xf32, #tpu.memory_space<vmem>>, %arg6: memref<104x128xf32, #tpu.memory_space<vmem>>, %arg7: memref<104x128xf32, #tpu.memory_space<vmem>>) attributes {dimension_semantics = [#tpu.dimension_semantics<parallel>, #tpu.dimension_semantics<arbitrary>], iteration_bounds = array<i64: 2, 2>, scalar_prefetch = 0 : i64, scratch_operands = 1 : i64, tpu.core_type = #tpu.core_type<tc>, window_params = [{transform_indices = @transform_0, window_bounds = array<i64: 104, 128>}, {transform_indices = @transform_1, window_bounds = array<i64: 128, 128>}, {transform_indices = @transform_2, window_bounds = array<i64: 1, 128>}, {transform_indices = @transform_3, window_bounds = array<i64: 1, 128>}, {transform_indices = @transform_4, window_bounds = array<i64: 104, 128>}]} {
    %c0_i32 = arith.constant 0 : i32
    %0 = arith.cmpi eq, %arg1, %c0_i32 : i32
    %1 = arith.extui %0 : i1 to i32
    %c0_i32_0 = arith.constant 0 : i32
    %2 = arith.cmpi ne, %1, %c0_i32_0 : i32
    scf.if %2 {
      %cst_9 = arith.constant 0.000000e+00 : f32
      %12 = vector.broadcast %cst_9 : f32 to vector<104x128xf32>
      %c0_10 = arith.constant 0 : index
      %c0_11 = arith.constant 0 : index
      %13 = vector.load %arg7[%c0_10, %c0_11] : memref<104x128xf32, #tpu.memory_space<vmem>>, vector<104x128xf32>
      tpu.vector_store %arg7[%c0_10, %c0_11], %12 {strides = array<i32>} : memref<104x128xf32, #tpu.memory_space<vmem>>, vector<104x128xf32>,
    } else {
    }
    %c0 = arith.constant 0 : index
    %c0_1 = arith.constant 0 : index
    %3 = vector.load %arg7[%c0, %c0_1] : memref<104x128xf32, #tpu.memory_space<vmem>>, vector<104x128xf32>
    %c0_2 = arith.constant 0 : index
    %c0_3 = arith.constant 0 : index
    %4 = vector.load %arg2[%c0_2, %c0_3] : memref<104x128xbf16, #tpu.memory_space<vmem>>, vector<104x128xbf16>
    %c0_4 = arith.constant 0 : index
    %c0_5 = arith.constant 0 : index
    %5 = vector.load %arg3[%c0_4, %c0_5] : memref<128x128xbf16, #tpu.memory_space<vmem>>, vector<128x128xbf16>
    %cst = arith.constant dense<0.000000e+00> : vector<104x128xf32>
    %6 = tpu.matmul %4, %5, %cst {dimension_numbers = #tpu.dot_dimension_numbers<[1], [0], [0], [1], [0, 0, 1, 1], [], []>} : vector<104x128xbf16>, vector<128x128xbf16>, vector<104x128xf32> -> vector<104x128xf32>
    %7 = arith.addf %3, %6 : vector<104x128xf32>
    %c0_6 = arith.constant 0 : index
    %c0_7 = arith.constant 0 : index
    %8 = vector.load %arg7[%c0_6, %c0_7] : memref<104x128xf32, #tpu.memory_space<vmem>>, vector<104x128xf32>
    tpu.vector_store %arg7[%c0_6, %c0_7], %7 {strides = array<i32>} : memref<104x128xf32, #tpu.memory_space<vmem>>, vector<104x128xf32>,
    %c1_i32 = arith.constant 1 : i32
    %9 = arith.cmpi eq, %arg1, %c1_i32 : i32
    %10 = arith.extui %9 : i1 to i32
    %c0_i32_8 = arith.constant 0 : i32
    %11 = arith.cmpi ne, %10, %c0_i32_8 : i32
    scf.if %11 {
      %c0_9 = arith.constant 0 : index
      %c0_10 = arith.constant 0 : index
      %12 = vector.load %arg7[%c0_9, %c0_10] : memref<104x128xf32, #tpu.memory_space<vmem>>, vector<104x128xf32>
      %cst_11 = arith.constant dense<0.000000e+00> : vector<128xf32>
      %13 = vector.multi_reduction <add>, %12, %cst_11 [0] : vector<104x128xf32> to vector<128xf32>
      %14 = vector.shape_cast %13 : vector<128xf32> to vector<1x128xf32>
      %15 = arith.mulf %12, %12 : vector<104x128xf32>
      %cst_12 = arith.constant dense<0.000000e+00> : vector<128xf32>
      %16 = vector.multi_reduction <add>, %15, %cst_12 [0] : vector<104x128xf32> to vector<128xf32>
      %17 = vector.shape_cast %16 : vector<128xf32> to vector<1x128xf32>
      %cst_13 = arith.constant 0.0102040814 : f32
      %18 = vector.broadcast %cst_13 : f32 to vector<1x128xf32>
      %19 = arith.mulf %14, %18 : vector<1x128xf32>
      %cst_14 = arith.constant 0.0102040814 : f32
      %20 = vector.broadcast %cst_14 : f32 to vector<1x128xf32>
      %21 = arith.mulf %17, %20 : vector<1x128xf32>
      %22 = arith.mulf %19, %19 : vector<1x128xf32>
      %23 = arith.subf %21, %22 : vector<1x128xf32>
      %cst_15 = arith.constant 0.000000e+00 : f32
      %24 = vector.broadcast %cst_15 : f32 to vector<1x128xf32>
      %25 = arith.maximumf %23, %24 : vector<1x128xf32>
      %cst_16 = arith.constant 9.99999974E-6 : f32
      %26 = vector.broadcast %cst_16 : f32 to vector<1x128xf32>
      %27 = arith.addf %25, %26 : vector<1x128xf32>
      %28 = math.rsqrt %27 : vector<1x128xf32>
      %c0_17 = arith.constant 0 : index
      %c0_18 = arith.constant 0 : index
      %29 = vector.load %arg4[%c0_17, %c0_18] : memref<1x128xf32, #tpu.memory_space<vmem>>, vector<1x128xf32>
      %30 = arith.mulf %28, %29 : vector<1x128xf32>
      %c0_19 = arith.constant 0 : index
      %c0_20 = arith.constant 0 : index
      %31 = vector.load %arg5[%c0_19, %c0_20] : memref<1x128xf32, #tpu.memory_space<vmem>>, vector<1x128xf32>
      %32 = arith.mulf %19, %30 : vector<1x128xf32>
      %33 = arith.subf %31, %32 : vector<1x128xf32>
      %34 = vector.broadcast %30 : vector<1x128xf32> to vector<104x128xf32>
      %35 = arith.mulf %12, %34 : vector<104x128xf32>
      %36 = vector.broadcast %33 : vector<1x128xf32> to vector<104x128xf32>
      %37 = arith.addf %35, %36 : vector<104x128xf32>
      %c0_21 = arith.constant 0 : index
      %c0_22 = arith.constant 0 : index
      %38 = vector.load %arg6[%c0_21, %c0_22] : memref<104x128xf32, #tpu.memory_space<vmem>>, vector<104x128xf32>
      tpu.vector_store %arg6[%c0_21, %c0_22], %37 {strides = array<i32>} : memref<104x128xf32, #tpu.memory_space<vmem>>, vector<104x128xf32>,
    } else {
    }
    return
  }
  func.func @transform_0(%arg0: i32, %arg1: i32) -> (i32, i32) {
    %c0_i32 = arith.constant 0 : i32
    %c0_i32_0 = arith.constant 0 : i32
    return %c0_i32, %arg1 : i32, i32
  }
  func.func @transform_1(%arg0: i32, %arg1: i32) -> (i32, i32) {
    %c0_i32 = arith.constant 0 : i32
    return %arg1, %arg0 : i32, i32
  }
  func.func @transform_2(%arg0: i32, %arg1: i32) -> (i32, i32) {
    %c0_i32 = arith.constant 0 : i32
    %c0_i32_0 = arith.constant 0 : i32
    return %c0_i32, %arg0 : i32, i32
  }
  func.func @transform_3(%arg0: i32, %arg1: i32) -> (i32, i32) {
    %c0_i32 = arith.constant 0 : i32
    %c0_i32_0 = arith.constant 0 : i32
    return %c0_i32, %arg0 : i32, i32
  }
  func.func @transform_4(%arg0: i32, %arg1: i32) -> (i32, i32) {
    %c0_i32 = arith.constant 0 : i32
    %c0_i32_0 = arith.constant 0 : i32
    return %c0_i32, %arg0 : i32, i32
  }
}

</mosaic_0001>

<llo_original>
// kernel: tpu_custom_call.1
$region0: #{tpu_custom_call.1}
  #allocation0 [shape = 'u32[]', space=smem, size = 0x4, offset = 0x4, fixed_abs, tag = 'smem constant byte address 0x4 - core index']
  #allocation1 [shape = 'u32[144,128]{1,0:T(1,128)}', space=vmem, size = 0x12000, scoped, tag = 'internal scratch']
  #allocation2 [shape = 'f32[104,128]{1,0:T(8,128)}', space=vmem, size = 0xd000, scoped, tag = 'scratch operand']
  %s0 = inlined_call_operand.hbm [shape: bf16[104,256], index: 0, kind: input, shape index: {}]
  %s1 = inlined_call_operand.hbm [shape: bf16[256,256], index: 1, kind: input, shape index: {}]
  %s2 = inlined_call_operand.vmem [shape: f32[1,256], index: 2, kind: input, shape index: {}]
  %s3 = inlined_call_operand.vmem [shape: f32[1,256], index: 3, kind: input, shape index: {}]
  %s4 = inlined_call_operand.hbm [shape: f32[104,256], index: 4, kind: output, shape index: {}]
  %s5 = sld [smem:[#allocation0]]
  $region65: #{tpu_custom_call.1} parent=0
    _
  %s7 = ssub.s32 1, %s5
  %s8 = scalar_select 0, %s7, %s5
  $region1: #{tpu_custom_call.1} parent=0
    #allocation3 [shape = 'u8[53248]{0}', space=vmem, size = 0xd000, scoped, tag = 'input window, operand 0']
    #allocation4 [shape = 's32[2]{0}', space=sflag, size = 0x8, scoped, tag = 'scoped memory for tpu_custom_call.1']
    #allocation5 [shape = 's32[2]{0}', space=sflag, size = 0x8, scoped, tag = 'scoped memory for tpu_custom_call.1']
    #allocation6 [shape = 'u8[65536]{0}', space=vmem, size = 0x10000, scoped, tag = 'input window, operand 1']
    #allocation7 [shape = 's32[2]{0}', space=sflag, size = 0x8, scoped, tag = 'scoped memory for tpu_custom_call.1']
    #allocation8 [shape = 'u8[106496]{0}', space=vmem, size = 0x1a000, scoped, tag = 'output window, operand 0']
    %9 = vsyncpa [#allocation4], 0
    %s10 = scalar_lea.sflag [#allocation4], 1
    %11 = vsyncpa %s10, 0
    %12 = vsyncpa [#allocation7], 0
    %s13 = scalar_lea.sflag [#allocation7], 1
    %14 = vsyncpa %s13, 0
    %15 = vsyncpa [#allocation5], 0
    %s16 = scalar_lea.sflag [#allocation5], 1
    %17 = vsyncpa %s16, 0
    loop: start=0, step=1, limit=6
    $region2: #{tpu_custom_call.1} parent=1 // loop_pre_header
      _
    $region3: #{tpu_custom_call.1} parent=1 // loop_header
      %s19 = sphi 0, %s23
      %p20 = scmp.ge.s32.totalorder %s19, 6
      %s26 = sphi 0, %s38
      %s27 = sphi 0, %s34
      %s28 = sphi 0, %s26
      %s29 = sphi 0, %s27
      %s30 = sphi 0, %s28
      %s31 = sphi 0, %s29
      %s41 = sphi 0, %s43
      %s44 = sphi 0, %s41
      %s45 = sphi 0, %s44
      %s61 = sphi 0, %s45
      %s69 = sphi 0, %s71
      %s72 = sphi 0, %s69
      %s73 = sphi 0, %s72
      %s89 = sphi 0, %s73
      %s95 = sphi 0, %s97
      %s98 = sphi 0, %s95
      %s99 = sphi 0, %s98
      %s115 = sphi 0, %s99
      %s121 = sphi 0, %s123
      %s124 = sphi 0, %s121
      %s125 = sphi 0, %s124
      %s141 = sphi 0, %s125
      %s147 = sphi 0, %s149
      %s150 = sphi 0, %s147
      %s151 = sphi 0, %s150
      %s167 = sphi 0, %s151
    $region4: #{tpu_custom_call.1} parent=1 // loop_header_branch
      %22 = sbr.rel (%p20) target = $region8
    $region5: #{tpu_custom_call.1} parent=1 // loop_body
      %s24 = ssub.s32 %s19, 1
      %s25 = ssub.s32 %s19, 2
      %s32 = sadd.s32 1, %s27
      %p33 = scmp.ge.s32.totalorder %s32, 2
      %s34 = scalar_select %p33, 0, %s32
      %s35 = sadd.s32 1, %s26
      %s36 = scalar_select %p33, %s35, %s26
      %p37 = scmp.ge.s32.totalorder %s36, 2
      %s38 = scalar_select %p37, 0, %s36
      %s39 = ssub.s32 %s27, %s34
      %p40 = scmp.eq.s32.totalorder %s39, 0
      %s42 = sadd.s32 %s41, 1
      %s43 = scalar_select %p40, %s41, %s42
      %p46 = pneg %p40
      %p47 = scmp.eq.s32.totalorder %s19, 3
      %p48 = por %p46, %p47
      %p49 = scmp.ne.s32.totalorder %s41, %s44
      %p50 = scmp.eq.s32.totalorder %s19, 0
      %p51 = por %p49, %p50
      %p52 = scmp.ne.s32.totalorder %s41, %s44
      %p53 = scmp.eq.s32.totalorder %s24, 3
      %p54 = por %p52, %p53
      %p55 = scmp.ne.s32.totalorder %s44, %s45
      %p56 = scmp.eq.s32.totalorder %s24, 0
      %p57 = por %p55, %p56
      %p58 = scmp.ne.s32.totalorder %s44, %s45
      %p59 = scmp.eq.s32.totalorder %s25, 3
      %p60 = por %p58, %p59
      %p62 = scmp.ne.s32.totalorder %s45, %s61
      %p63 = scmp.eq.s32.totalorder %s25, 0
      %p64 = por %p62, %p63
      %s65 = ssub.s32 %s27, %s34
      %s66 = ssub.s32 %s26, %s38
      %s67 = sor.u32 %s65, %s66
      %p68 = scmp.eq.s32.totalorder %s67, 0
      %s70 = sadd.s32 %s69, 1
      %s71 = scalar_select %p68, %s69, %s70
      %p74 = pneg %p68
      %p75 = scmp.eq.s32.totalorder %s19, 3
      %p76 = por %p74, %p75
      %p77 = scmp.ne.s32.totalorder %s69, %s72
      %p78 = scmp.eq.s32.totalorder %s19, 0
      %p79 = por %p77, %p78
      %p80 = scmp.ne.s32.totalorder %s69, %s72
      %p81 = scmp.eq.s32.totalorder %s24, 3
      %p82 = por %p80, %p81
      %p83 = scmp.ne.s32.totalorder %s72, %s73
      %p84 = scmp.eq.s32.totalorder %s24, 0
      %p85 = por %p83, %p84
      %p86 = scmp.ne.s32.totalorder %s72, %s73
      %p87 = scmp.eq.s32.totalorder %s25, 3
      %p88 = por %p86, %p87
      %p90 = scmp.ne.s32.totalorder %s73, %s89
      %p91 = scmp.eq.s32.totalorder %s25, 0
      %p92 = por %p90, %p91
      %s93 = ssub.s32 %s26, %s38
      %p94 = scmp.eq.s32.totalorder %s93, 0
      %s96 = sadd.s32 %s95, 1
      %s97 = scalar_select %p94, %s95, %s96
      %p100 = pneg %p94
      %p101 = scmp.eq.s32.totalorder %s19, 3
      %p102 = por %p100, %p101
      %p103 = scmp.ne.s32.totalorder %s95, %s98
      %p104 = scmp.eq.s32.totalorder %s19, 0
      %p105 = por %p103, %p104
      %p106 = scmp.ne.s32.totalorder %s95, %s98
      %p107 = scmp.eq.s32.totalorder %s24, 3
      %p108 = por %p106, %p107
      %p109 = scmp.ne.s32.totalorder %s98, %s99
      %p110 = scmp.eq.s32.totalorder %s24, 0
      %p111 = por %p109, %p110
      %p112 = scmp.ne.s32.totalorder %s98, %s99
      %p113 = scmp.eq.s32.totalorder %s25, 3
      %p114 = por %p112, %p113
      %p116 = scmp.ne.s32.totalorder %s99, %s115
      %p117 = scmp.eq.s32.totalorder %s25, 0
      %p118 = por %p116, %p117
      %s119 = ssub.s32 %s26, %s38
      %p120 = scmp.eq.s32.totalorder %s119, 0
      %s122 = sadd.s32 %s121, 1
      %s123 = scalar_select %p120, %s121, %s122
      %p126 = pneg %p120
      %p127 = scmp.eq.s32.totalorder %s19, 3
      %p128 = por %p126, %p127
      %p129 = scmp.ne.s32.totalorder %s121, %s124
      %p130 = scmp.eq.s32.totalorder %s19, 0
      %p131 = por %p129, %p130
      %p132 = scmp.ne.s32.totalorder %s121, %s124
      %p133 = scmp.eq.s32.totalorder %s24, 3
      %p134 = por %p132, %p133
      %p135 = scmp.ne.s32.totalorder %s124, %s125
      %p136 = scmp.eq.s32.totalorder %s24, 0
      %p137 = por %p135, %p136
      %p138 = scmp.ne.s32.totalorder %s124, %s125
      %p139 = scmp.eq.s32.totalorder %s25, 3
      %p140 = por %p138, %p139
      %p142 = scmp.ne.s32.totalorder %s125, %s141
      %p143 = scmp.eq.s32.totalorder %s25, 0
      %p144 = por %p142, %p143
      %s145 = ssub.s32 %s26, %s38
      %p146 = scmp.eq.s32.totalorder %s145, 0
      %s148 = sadd.s32 %s147, 1
      %s149 = scalar_select %p146, %s147, %s148
      %p152 = pneg %p146
      %p153 = scmp.eq.s32.totalorder %s19, 3
      %p154 = por %p152, %p153
      %p155 = scmp.ne.s32.totalorder %s147, %s150
      %p156 = scmp.eq.s32.totalorder %s19, 0
      %p157 = por %p155, %p156
      %p158 = scmp.ne.s32.totalorder %s147, %s150
      %p159 = scmp.eq.s32.totalorder %s24, 3
      %p160 = por %p158, %p159
      %p161 = scmp.ne.s32.totalorder %s150, %s151
      %p162 = scmp.eq.s32.totalorder %s24, 0
      %p163 = por %p161, %p162
      %p164 = scmp.ne.s32.totalorder %s150, %s151
      %p165 = scmp.eq.s32.totalorder %s25, 3
      %p166 = por %p164, %p165
      %p168 = scmp.ne.s32.totalorder %s151, %s167
      %p169 = scmp.eq.s32.totalorder %s25, 0
      %p170 = por %p168, %p169
      %p171 = scmp.le.s32.totalorder 1, %s19
      %p172 = scmp.lt.s32.totalorder %s19, 5
      %p173 = pnand %p171, %p172
      %p174 = pneg %p173
      // Predicated region
      $region9: #{tpu_custom_call.1} parent=5 // pred_check
        _
      $region10: #{tpu_custom_call.1} parent=5 // pred_check_branch
        %176 = sbr.rel (%p173) target = $region12
      $region11: #{tpu_custom_call.1} parent=5 // pred_region
        %s177 = ssub.s32 %s19, 1
      $region12: #{tpu_custom_call.1} parent=5 // pred_fallthru
        _
      %p178 = scmp.lt.s32.totalorder %s19, 4
      // Predicated region
      $region13: #{tpu_custom_call.1} parent=5 // pred_check
        %p179 = pneg %p178
      $region14: #{tpu_custom_call.1} parent=5 // pred_check_branch
        %181 = sbr.rel (%p179) target = $region16
      $region15: #{tpu_custom_call.1} parent=5 // pred_region
        // Predicated region
        $region17: #{tpu_custom_call.1} parent=15 // pred_check
          %p182 = pneg %p51
        $region18: #{tpu_custom_call.1} parent=15 // pred_check_branch
          %184 = sbr.rel (%p182) target = $region20
        $region19: #{tpu_custom_call.1} parent=15 // pred_region
          %s185 = sand.u32 %s41, 1
          %s186 = scalar_lea.sflag [#allocation4], %s185
          %s187 = sand.u32 %s41, 1
          %s188 = smul.addr %s187, 52
          %s189 = scalar_lea.vmem [#allocation3], %s188
          %s191 = ssub.s32 832, 832
          %192 = vsyncadd %s186, %s191
          %s193 = smul.addr %s27, 64
          %s194 = scalar_lea.hbm %s0, %s193
          %s195 = sshll.u32 %s189, 4
          %s196 = int_to_ptr.vmem [resolvable:$true] %s195
          %201 = dma.hbm_to_vmem [thread:$0]  %s194, 832, %s196, %s186, 128, 64, 4
        $region20: #{tpu_custom_call.1} parent=15 // pred_fallthru
          _
        // Predicated region
        $region21: #{tpu_custom_call.1} parent=15 // pred_check
          %p202 = pneg %p79
        $region22: #{tpu_custom_call.1} parent=15 // pred_check_branch
          %204 = sbr.rel (%p202) target = $region24
        $region23: #{tpu_custom_call.1} parent=15 // pred_region
          %s205 = sand.u32 %s69, 1
          %s206 = scalar_lea.sflag [#allocation7], %s205
          %s207 = sand.u32 %s69, 1
          %s208 = smul.addr %s207, 64
          %s209 = scalar_lea.vmem [#allocation6], %s208
          %s210 = smul.u32 16, %s27
          %s212 = ssub.s32 1024, 1024
          %213 = vsyncadd %s206, %s212
          %s214 = smul.addr %s210, 2
          %s215 = sadd.s32 %s26, %s214
          %s216 = smul.addr %s215, 64
          %s217 = scalar_lea.hbm %s1, %s216
          %s218 = sshll.u32 %s209, 4
          %s219 = int_to_ptr.vmem [resolvable:$true] %s218
          %224 = dma.hbm_to_vmem [thread:$0]  %s217, 1024, %s219, %s206, 128, 64, 4
        $region24: #{tpu_custom_call.1} parent=15 // pred_fallthru
          _
        // Predicated region
        $region25: #{tpu_custom_call.1} parent=15 // pred_check
          %p225 = pneg %p105
        $region26: #{tpu_custom_call.1} parent=15 // pred_check_branch
          %227 = sbr.rel (%p225) target = $region28
        $region27: #{tpu_custom_call.1} parent=15 // pred_region
          %p228 = scmp.lt.s32.totalorder %s26, 1
          %s229 = scalar_select %p228, %s26, 1
          %s230 = scalar_lea.vmem %s2, %s229
        $region28: #{tpu_custom_call.1} parent=15 // pred_fallthru
          _
        // Predicated region
        $region29: #{tpu_custom_call.1} parent=15 // pred_check
          %p231 = pneg %p131
        $region30: #{tpu_custom_call.1} parent=15 // pred_check_branch
          %233 = sbr.rel (%p231) target = $region32
        $region31: #{tpu_custom_call.1} parent=15 // pred_region
          %p234 = scmp.lt.s32.totalorder %s26, 1
          %s235 = scalar_select %p234, %s26, 1
          %s236 = scalar_lea.vmem %s3, %s235
        $region32: #{tpu_custom_call.1} parent=15 // pred_fallthru
          _
      $region16: #{tpu_custom_call.1} parent=5 // pred_fallthru
        _
      %p237 = scmp.le.s32.totalorder 1, %s19
      %p238 = scmp.lt.s32.totalorder %s19, 5
      %p239 = pnand %p237, %p238
      %p240 = pneg %p239
      // Predicated region
      $region33: #{tpu_custom_call.1} parent=5 // pred_check
        _
      $region34: #{tpu_custom_call.1} parent=5 // pred_check_branch
        %242 = sbr.rel (%p239) target = $region36
      $region35: #{tpu_custom_call.1} parent=5 // pred_region
        %s243 = ssub.s32 %s19, 1
        %s244 = sand.u32 %s44, 1
        %s245 = scalar_lea.sflag [#allocation4], %s244
        %s246 = sand.u32 %s44, 1
        %s247 = smul.addr %s246, 52
        %s248 = scalar_lea.vmem [#allocation3], %s247
        // Predicated region
        $region37: #{tpu_custom_call.1} parent=35 // pred_check
          %p249 = pneg %p57
        $region38: #{tpu_custom_call.1} parent=35 // pred_check_branch
          %251 = sbr.rel (%p249) target = $region40
        $region39: #{tpu_custom_call.1} parent=35 // pred_region
          %252 = dma.done %s245, 832
        $region40: #{tpu_custom_call.1} parent=35 // pred_fallthru
          _
        %s253 = sand.u32 %s72, 1
        %s254 = scalar_lea.sflag [#allocation7], %s253
        %s255 = sand.u32 %s72, 1
        %s256 = smul.addr %s255, 64
        %s257 = scalar_lea.vmem [#allocation6], %s256
        // Predicated region
        $region41: #{tpu_custom_call.1} parent=35 // pred_check
          %p258 = pneg %p85
        $region42: #{tpu_custom_call.1} parent=35 // pred_check_branch
          %260 = sbr.rel (%p258) target = $region44
        $region43: #{tpu_custom_call.1} parent=35 // pred_region
          %261 = dma.done %s254, 1024
        $region44: #{tpu_custom_call.1} parent=35 // pred_fallthru
          _
        %s262 = sand.u32 %s44, 1
        %s263 = scalar_lea.sflag [#allocation4], %s262
        %s264 = sand.u32 %s44, 1
        %s265 = smul.addr %s264, 52
        %s266 = scalar_lea.vmem [#allocation3], %s265
        %p267 = pneg %p57
        %p268 = pneg %p54
        %s269 = sand.u32 %s72, 1
        %s270 = scalar_lea.sflag [#allocation7], %s269
        %s271 = sand.u32 %s72, 1
        %s272 = smul.addr %s271, 64
        %s273 = scalar_lea.vmem [#allocation6], %s272
        %p274 = pneg %p85
        %p275 = pneg %p82
        %p276 = scmp.lt.s32.totalorder %s28, 1
        %s277 = scalar_select %p276, %s28, 1
        %s278 = scalar_lea.vmem %s2, %s277
        %p279 = pneg %p111
        %p280 = pneg %p108
        %p281 = scmp.lt.s32.totalorder %s28, 1
        %s282 = scalar_select %p281, %s28, 1
        %s283 = scalar_lea.vmem %s3, %s282
        %p284 = pneg %p137
        %p285 = pneg %p134
        %p286 = pneg %p163
        %p287 = pneg %p160
        %s288 = sand.u32 %s150, 1
        %s289 = scalar_lea.sflag [#allocation5], %s288
        %s290 = sand.u32 %s150, 1
        %s291 = smul.addr %s290, 104
        %s292 = scalar_lea.vmem [#allocation8], %s291
        %s293 = smul.u32 16, %s29
        %p294 = scmp.lt.s32.totalorder %s28, 1
        %s295 = scalar_select %p294, %s28, 1
        %s296 = scalar_lea.vmem %s2, %s295
        %p297 = scmp.lt.s32.totalorder %s28, 1
        %s298 = scalar_select %p297, %s28, 1
        %s299 = scalar_lea.vmem %s3, %s298
        %p301 = scmp.eq.s32.totalorder %s29, 0
        // Predicated region
        $region45: #{tpu_custom_call.1} parent=35 // pred_check
          %p302 = pneg %p301
        $region46: #{tpu_custom_call.1} parent=35 // pred_check_branch
          %304 = sbr.rel (%p302) target = $region48
        $region47: #{tpu_custom_call.1} parent=35 // pred_region
          %305 = vst [vmem:[#allocation2] sm:$0xff] 0.0
          %306 = vst [vmem:[#allocation2 + $0x8] sm:$0xff] 0.0
          %307 = vst [vmem:[#allocation2 + $0x10] sm:$0xff] 0.0
          %308 = vst [vmem:[#allocation2 + $0x18] sm:$0xff] 0.0
          %309 = vst [vmem:[#allocation2 + $0x20] sm:$0xff] 0.0
          %310 = vst [vmem:[#allocation2 + $0x28] sm:$0xff] 0.0
          %311 = vst [vmem:[#allocation2 + $0x30] sm:$0xff] 0.0
          %312 = vst [vmem:[#allocation2 + $0x38] sm:$0xff] 0.0
          %313 = vst [vmem:[#allocation2 + $0x40] sm:$0xff] 0.0
          %314 = vst [vmem:[#allocation2 + $0x48] sm:$0xff] 0.0
          %315 = vst [vmem:[#allocation2 + $0x50] sm:$0xff] 0.0
          %316 = vst [vmem:[#allocation2 + $0x58] sm:$0xff] 0.0
          %317 = vst [vmem:[#allocation2 + $0x60] sm:$0xff] 0.0
        $region48: #{tpu_custom_call.1} parent=35 // pred_fallthru
          _
        %v318 = vld [vmem:[#allocation2] sm:$0xff]
        %v319 = vld [vmem:[#allocation2 + $0x8] sm:$0xff]
        %v320 = vld [vmem:[#allocation2 + $0x10] sm:$0xff]
        %v321 = vld [vmem:[#allocation2 + $0x18] sm:$0xff]
        %v322 = vld [vmem:[#allocation2 + $0x20] sm:$0xff]
        %v323 = vld [vmem:[#allocation2 + $0x28] sm:$0xff]
        %v324 = vld [vmem:[#allocation2 + $0x30] sm:$0xff]
        %v325 = vld [vmem:[#allocation2 + $0x38] sm:$0xff]
        %v326 = vld [vmem:[#allocation2 + $0x40] sm:$0xff]
        %v327 = vld [vmem:[#allocation2 + $0x48] sm:$0xff]
        %v328 = vld [vmem:[#allocation2 + $0x50] sm:$0xff]
        %v329 = vld [vmem:[#allocation2 + $0x58] sm:$0xff]
        %v330 = vld [vmem:[#allocation2 + $0x60] sm:$0xff]
        %v331 = vld [vmem:[%s248] sm:$0xf]
        %v332 = vld [vmem:[%s248 + $0x4] sm:$0xf]
        %v333 = vld [vmem:[%s248 + $0x8] sm:$0xf]
        %v334 = vld [vmem:[%s248 + $0xc] sm:$0xf]
        %v335 = vld [vmem:[%s248 + $0x10] sm:$0xf]
        %v336 = vld [vmem:[%s248 + $0x14] sm:$0xf]
        %v337 = vld [vmem:[%s248 + $0x18] sm:$0xf]
        %v338 = vld [vmem:[%s248 + $0x1c] sm:$0xf]
        %v339 = vld [vmem:[%s248 + $0x20] sm:$0xf]
        %v340 = vld [vmem:[%s248 + $0x24] sm:$0xf]
        %v341 = vld [vmem:[%s248 + $0x28] sm:$0xf]
        %v342 = vld [vmem:[%s248 + $0x2c] sm:$0xf]
        %v343 = vld [vmem:[%s248 + $0x30] sm:$0xf]
        %v344 = vld [vmem:[%s257] sm:$0xf]
        %v345 = vld [vmem:[%s257 + $0x4] sm:$0xf]
        %v346 = vld [vmem:[%s257 + $0x8] sm:$0xf]
        %v347 = vld [vmem:[%s257 + $0xc] sm:$0xf]
        %v348 = vld [vmem:[%s257 + $0x10] sm:$0xf]
        %v349 = vld [vmem:[%s257 + $0x14] sm:$0xf]
        %v350 = vld [vmem:[%s257 + $0x18] sm:$0xf]
        %v351 = vld [vmem:[%s257 + $0x1c] sm:$0xf]
        %v352 = vld [vmem:[%s257 + $0x20] sm:$0xf]
        %v353 = vld [vmem:[%s257 + $0x24] sm:$0xf]
        %v354 = vld [vmem:[%s257 + $0x28] sm:$0xf]
        %v355 = vld [vmem:[%s257 + $0x2c] sm:$0xf]
        %v356 = vld [vmem:[%s257 + $0x30] sm:$0xf]
        %v357 = vld [vmem:[%s257 + $0x34] sm:$0xf]
        %v358 = vld [vmem:[%s257 + $0x38] sm:$0xf]
        %v359 = vld [vmem:[%s257 + $0x3c] sm:$0xf]
        %v373 = vunpack.c.l.b16 %v331
        %v374 = vunpack.c.l.b16 %v332
        %v375 = vunpack.c.l.b16 %v333
        %v376 = vunpack.c.l.b16 %v334
        %v377 = vunpack.c.l.b16 %v335
        %v378 = vunpack.c.l.b16 %v336
        %v379 = vunpack.c.l.b16 %v337
        %v380 = vunpack.c.l.b16 %v338
        %v381 = vunpack.c.l.b16 %v339
        %v382 = vunpack.c.l.b16 %v340
        %v383 = vunpack.c.l.b16 %v341
        %v384 = vunpack.c.l.b16 %v342
        %v385 = vunpack.c.l.b16 %v343
        %v386 = vpack.c.b16 %v374, %v373
        %v387 = vpack.c.b16 %v376, %v375
        %v388 = vpack.c.b16 %v378, %v377
        %v389 = vpack.c.b16 %v380, %v379
        %v390 = vpack.c.b16 %v382, %v381
        %v391 = vpack.c.b16 %v384, %v383
        %v392 = vpack.c.b16 %v385, %v385
        %v416 = vunpack.c.l.b16 %v344
        %v417 = vunpack.c.l.b16 %v345
        %v418 = vunpack.c.l.b16 %v346
        %v419 = vunpack.c.l.b16 %v347
        %v420 = vunpack.c.l.b16 %v348
        %v421 = vunpack.c.l.b16 %v349
        %v422 = vunpack.c.l.b16 %v350
        %v423 = vunpack.c.l.b16 %v351
        %v424 = vunpack.c.l.b16 %v352
        %v425 = vunpack.c.l.b16 %v353
        %v426 = vunpack.c.l.b16 %v354
        %v427 = vunpack.c.l.b16 %v355
        %v428 = vunpack.c.l.b16 %v356
        %v429 = vunpack.c.l.b16 %v357
        %v430 = vunpack.c.l.b16 %v358
        %v431 = vunpack.c.l.b16 %v359
        %v432 = vpack.c.b16 %v417, %v416
        %v433 = vpack.c.b16 %v419, %v418
        %v434 = vpack.c.b16 %v421, %v420
        %v435 = vpack.c.b16 %v423, %v422
        %v436 = vpack.c.b16 %v425, %v424
        %v437 = vpack.c.b16 %v427, %v426
        %v438 = vpack.c.b16 %v429, %v428
        %v439 = vpack.c.b16 %v431, %v430
        %448 = vmatprep.subr.bf16.mxu0 0
        %449 = vmatpush1.bf16.msra.mxu0 %v432
        %450 = vmatprep.subr.bf16.mxu0 0
        %451 = vmatpush1.bf16.msra.mxu0 %v433
        %452 = vmatprep.subr.bf16.mxu0 0
        %453 = vmatpush1.bf16.msra.mxu0 %v434
        %454 = vmatprep.subr.bf16.mxu0 0
        %455 = vmatpush1.bf16.msra.mxu0 %v435
        %456 = vmatprep.subr.bf16.mxu0 0
        %457 = vmatpush1.bf16.msra.mxu0 %v436
        %458 = vmatprep.subr.bf16.mxu0 0
        %459 = vmatpush1.bf16.msra.mxu0 %v437
        %460 = vmatprep.subr.bf16.mxu0 0
        %461 = vmatpush1.bf16.msra.mxu0 %v438
        %462 = vmatprep.subr.bf16.mxu0 0
        %463 = vmatpush1.bf16.msra.mxu0 %v439
        %464 = vmatprep.subr.bf16.mxu0 0
        %465 = vmatpush1.bf16.msra.mxu0 0
        %466 = vmatprep.subr.bf16.mxu0 0
        %467 = vmatpush1.bf16.msra.mxu0 0
        %468 = vmatprep.subr.bf16.mxu0 0
        %469 = vmatpush1.bf16.msra.mxu0 0
        %470 = vmatprep.subr.bf16.mxu0 0
        %471 = vmatpush1.bf16.msra.mxu0 0
        %472 = vmatprep.subr.bf16.mxu0 0
        %473 = vmatpush1.bf16.msra.mxu0 0
        %474 = vmatprep.subr.bf16.mxu0 0
        %475 = vmatpush1.bf16.msra.mxu0 0
        %476 = vmatprep.subr.bf16.mxu0 0
        %477 = vmatpush1.bf16.msra.mxu0 0
        %478 = vmatprep.subr.bf16.mxu0 0
        %479 = vmatpush1.bf16.msra.mxu0 0
        %480 = vmatprep.mubr.bf16.mxu0 0
        %481 = vmatmul.mubr.bf16.gmra.mrb[0].mxu0 %v386
        %v482 = vpop.f32.mrb[0].mxu0
        %v483 = vadd.f32 0.0, %v482
        %v484 = vpop.f32.mrb[0].mxu0
        %v485 = vpop.f32.mrb[0].mxu0
        %v486 = vadd.f32 0.0, %v485
        %v487 = vpop.f32.mrb[0].mxu0
        %488 = vmatprep.mubr.bf16.mxu0 0
        %489 = vmatmul.mubr.bf16.gmra.mrb[0].mxu0 %v387
        %v490 = vpop.f32.mrb[0].mxu0
        %v491 = vadd.f32 0.0, %v490
        %v492 = vpop.f32.mrb[0].mxu0
        %v493 = vpop.f32.mrb[0].mxu0
        %v494 = vadd.f32 0.0, %v493
        %v495 = vpop.f32.mrb[0].mxu0
        %496 = vmatprep.mubr.bf16.mxu0 0
        %497 = vmatmul.mubr.bf16.gmra.mrb[0].mxu0 %v388
        %v498 = vpop.f32.mrb[0].mxu0
        %v499 = vadd.f32 0.0, %v498
        %v500 = vpop.f32.mrb[0].mxu0
        %v501 = vpop.f32.mrb[0].mxu0
        %v502 = vadd.f32 0.0, %v501
        %v503 = vpop.f32.mrb[0].mxu0
        %504 = vmatprep.mubr.bf16.mxu0 0
        %505 = vmatmul.mubr.bf16.gmra.mrb[0].mxu0 %v389
        %v506 = vpop.f32.mrb[0].mxu0
        %v507 = vadd.f32 0.0, %v506
        %v508 = vpop.f32.mrb[0].mxu0
        %v509 = vpop.f32.mrb[0].mxu0
        %v510 = vadd.f32 0.0, %v509
        %v511 = vpop.f32.mrb[0].mxu0
        %512 = vmatprep.mubr.bf16.mxu0 0
        %513 = vmatmul.mubr.bf16.gmra.mrb[0].mxu0 %v390
        %v514 = vpop.f32.mrb[0].mxu0
        %v515 = vadd.f32 0.0, %v514
        %v516 = vpop.f32.mrb[0].mxu0
        %v517 = vpop.f32.mrb[0].mxu0
        %v518 = vadd.f32 0.0, %v517
        %v519 = vpop.f32.mrb[0].mxu0
        %520 = vmatprep.mubr.bf16.mxu0 0
        %521 = vmatmul.mubr.bf16.gmra.mrb[0].mxu0 %v391
        %v522 = vpop.f32.mrb[0].mxu0
        %v523 = vadd.f32 0.0, %v522
        %v524 = vpop.f32.mrb[0].mxu0
        %v525 = vpop.f32.mrb[0].mxu0
        %v526 = vadd.f32 0.0, %v525
        %v527 = vpop.f32.mrb[0].mxu0
        %528 = vmatprep.mubr.bf16.mxu0 0
        %529 = vmatmul.mubr.bf16.gmra.mrb[0].mxu0 %v392
        %v530 = vpop.f32.mrb[0].mxu0
        %v531 = vadd.f32 0.0, %v530
        %v532 = vpop.f32.mrb[0].mxu0
        %v533 = vpop.f32.mrb[0].mxu0
        %v534 = vpop.f32.mrb[0].mxu0
        %535 = vdwg.mxu0
        %v536 = vadd.f32 %v318, %v483
        %v537 = vadd.f32 %v319, %v486
        %v538 = vadd.f32 %v320, %v491
        %v539 = vadd.f32 %v321, %v494
        %v540 = vadd.f32 %v322, %v499
        %v541 = vadd.f32 %v323, %v502
        %v542 = vadd.f32 %v324, %v507
        %v543 = vadd.f32 %v325, %v510
        %v544 = vadd.f32 %v326, %v515
        %v545 = vadd.f32 %v327, %v518
        %v546 = vadd.f32 %v328, %v523
        %v547 = vadd.f32 %v329, %v526
        %v548 = vadd.f32 %v330, %v531
        %549 = vst [vmem:[#allocation2] sm:$0xff] %v536
        %550 = vst [vmem:[#allocation2 + $0x8] sm:$0xff] %v537
        %551 = vst [vmem:[#allocation2 + $0x10] sm:$0xff] %v538
        %552 = vst [vmem:[#allocation2 + $0x18] sm:$0xff] %v539
        %553 = vst [vmem:[#allocation2 + $0x20] sm:$0xff] %v540
        %554 = vst [vmem:[#allocation2 + $0x28] sm:$0xff] %v541
        %555 = vst [vmem:[#allocation2 + $0x30] sm:$0xff] %v542
        %556 = vst [vmem:[#allocation2 + $0x38] sm:$0xff] %v543
        %557 = vst [vmem:[#allocation2 + $0x40] sm:$0xff] %v544
        %558 = vst [vmem:[#allocation2 + $0x48] sm:$0xff] %v545
        %559 = vst [vmem:[#allocation2 + $0x50] sm:$0xff] %v546
        %560 = vst [vmem:[#allocation2 + $0x58] sm:$0xff] %v547
        %561 = vst [vmem:[#allocation2 + $0x60] sm:$0xff] %v548
        %p562 = scmp.eq.s32.totalorder %s29, 1
        // Predicated region
        $region49: #{tpu_custom_call.1} parent=35 // pred_check
          %p563 = pneg %p562
        $region50: #{tpu_custom_call.1} parent=35 // pred_check_branch
          %565 = sbr.rel (%p563) target = $region52
        $region51: #{tpu_custom_call.1} parent=35 // pred_region
          %v566 = vld [vmem:[#allocation2] sm:$0xff]
          %v567 = vld [vmem:[#allocation2 + $0x8] sm:$0xff]
          %v568 = vld [vmem:[#allocation2 + $0x10] sm:$0xff]
          %v569 = vld [vmem:[#allocation2 + $0x18] sm:$0xff]
          %v570 = vld [vmem:[#allocation2 + $0x20] sm:$0xff]
          %v571 = vld [vmem:[#allocation2 + $0x28] sm:$0xff]
          %v572 = vld [vmem:[#allocation2 + $0x30] sm:$0xff]
          %v573 = vld [vmem:[#allocation2 + $0x38] sm:$0xff]
          %v574 = vld [vmem:[#allocation2 + $0x40] sm:$0xff]
          %v575 = vld [vmem:[#allocation2 + $0x48] sm:$0xff]
          %v576 = vld [vmem:[#allocation2 + $0x50] sm:$0xff]
          %v577 = vld [vmem:[#allocation2 + $0x58] sm:$0xff]
          %v578 = vld [vmem:[#allocation2 + $0x60] sm:$0xff]
          %v579 = vadd.f32 %v566, %v567
          %v580 = vadd.f32 %v579, %v568
          %v581 = vadd.f32 %v580, %v569
          %v582 = vadd.f32 %v581, %v570
          %v583 = vadd.f32 %v582, %v571
          %v584 = vadd.f32 %v583, %v572
          %v585 = vadd.f32 %v584, %v573
          %v586 = vadd.f32 %v585, %v574
          %v587 = vadd.f32 %v586, %v575
          %v588 = vadd.f32 %v587, %v576
          %v589 = vadd.f32 %v588, %v577
          %v590 = vadd.f32 %v589, %v578
          %v591 = vrot.slane %v590, 4
          %v592 = vadd.f32 %v590, %v591
          %v593 = vrot.slane %v592, 2
          %v594 = vadd.f32 %v592, %v593
          %v595 = vrot.slane %v594, 1
          %v596 = vadd.f32 %v594, %v595
          %v597 = vmul.f32 %v566, %v566
          %v598 = vmul.f32 %v567, %v567
          %v599 = vmul.f32 %v568, %v568
          %v600 = vmul.f32 %v569, %v569
          %v601 = vmul.f32 %v570, %v570
          %v602 = vmul.f32 %v571, %v571
          %v603 = vmul.f32 %v572, %v572
          %v604 = vmul.f32 %v573, %v573
          %v605 = vmul.f32 %v574, %v574
          %v606 = vmul.f32 %v575, %v575
          %v607 = vmul.f32 %v576, %v576
          %v608 = vmul.f32 %v577, %v577
          %v609 = vmul.f32 %v578, %v578
          %v610 = vadd.f32 %v597, %v598
          %v611 = vadd.f32 %v610, %v599
          %v612 = vadd.f32 %v611, %v600
          %v613 = vadd.f32 %v612, %v601
          %v614 = vadd.f32 %v613, %v602
          %v615 = vadd.f32 %v614, %v603
          %v616 = vadd.f32 %v615, %v604
          %v617 = vadd.f32 %v616, %v605
          %v618 = vadd.f32 %v617, %v606
          %v619 = vadd.f32 %v618, %v607
          %v620 = vadd.f32 %v619, %v608
          %v621 = vadd.f32 %v620, %v609
          %v622 = vrot.slane %v621, 4
          %v623 = vadd.f32 %v621, %v622
          %v624 = vrot.slane %v623, 2
          %v625 = vadd.f32 %v623, %v624
          %v626 = vrot.slane %v625, 1
          %v627 = vadd.f32 %v625, %v626
          %v628 = vmul.f32 %v596, 0.010204081
          %v629 = vmul.f32 %v627, 0.010204081
          %v630 = vmul.f32 %v628, %v628
          %v631 = vsub.f32 %v629, %v630
          %v632 = vmax.f32 %v631, 0.0
          %v633 = vadd.f32 %v632, 1e-05
          %v634 = vrsqrt.pop %v633
          %v635 = vld [vmem:[%s296] sm:$0x1]
          %v636 = vmul.f32 %v634, %v635
          %v637 = vld [vmem:[%s299] sm:$0x1]
          %v638 = vmul.f32 %v628, %v636
          %v639 = vsub.f32 %v637, %v638
          %v640 = vlaneseq
          %v641 = vshrl.u32 %v640, 7
          %v642 = vsub.s32 0, %v641
          %v643 = vrot.slane %v636, %v642
          %v644 = vmul.f32 %v566, %v643
          %v645 = vmul.f32 %v567, %v643
          %v646 = vmul.f32 %v568, %v643
          %v647 = vmul.f32 %v569, %v643
          %v648 = vmul.f32 %v570, %v643
          %v649 = vmul.f32 %v571, %v643
          %v650 = vmul.f32 %v572, %v643
          %v651 = vmul.f32 %v573, %v643
          %v652 = vmul.f32 %v574, %v643
          %v653 = vmul.f32 %v575, %v643
          %v654 = vmul.f32 %v576, %v643
          %v655 = vmul.f32 %v577, %v643
          %v656 = vmul.f32 %v578, %v643
          %v658 = vlaneseq
          %v659 = vshrl.u32 %v658, 7
          %v660 = vsub.s32 0, %v659
          %v661 = vrot.slane %v639, %v660
          %v663 = vadd.f32 %v644, %v661
          %v664 = vadd.f32 %v645, %v661
          %v665 = vadd.f32 %v646, %v661
          %v666 = vadd.f32 %v647, %v661
          %v667 = vadd.f32 %v648, %v661
          %v668 = vadd.f32 %v649, %v661
          %v669 = vadd.f32 %v650, %v661
          %v670 = vadd.f32 %v651, %v661
          %v671 = vadd.f32 %v652, %v661
          %v672 = vadd.f32 %v653, %v661
          %v673 = vadd.f32 %v654, %v661
          %v674 = vadd.f32 %v655, %v661
          %v675 = vadd.f32 %v656, %v661
          %676 = vst [vmem:[%s292] sm:$0xff] %v663
          %677 = vst [vmem:[%s292 + $0x8] sm:$0xff] %v664
          %678 = vst [vmem:[%s292 + $0x10] sm:$0xff] %v665
          %679 = vst [vmem:[%s292 + $0x18] sm:$0xff] %v666
          %680 = vst [vmem:[%s292 + $0x20] sm:$0xff] %v667
          %681 = vst [vmem:[%s292 + $0x28] sm:$0xff] %v668
          %682 = vst [vmem:[%s292 + $0x30] sm:$0xff] %v669
          %683 = vst [vmem:[%s292 + $0x38] sm:$0xff] %v670
          %684 = vst [vmem:[%s292 + $0x40] sm:$0xff] %v671
          %685 = vst [vmem:[%s292 + $0x48] sm:$0xff] %v672
          %686 = vst [vmem:[%s292 + $0x50] sm:$0xff] %v673
          %687 = vst [vmem:[%s292 + $0x58] sm:$0xff] %v674
          %688 = vst [vmem:[%s292 + $0x60] sm:$0xff] %v675
        $region52: #{tpu_custom_call.1} parent=35 // pred_fallthru
          _
        %s689 = sand.u32 %s150, 1
        %s690 = scalar_lea.sflag [#allocation5], %s689
        %s691 = sand.u32 %s150, 1
        %s692 = smul.addr %s691, 104
        %s693 = scalar_lea.vmem [#allocation8], %s692
        // Predicated region
        $region53: #{tpu_custom_call.1} parent=35 // pred_check
          %p694 = pneg %p160
        $region54: #{tpu_custom_call.1} parent=35 // pred_check_branch
          %696 = sbr.rel (%p694) target = $region56
        $region55: #{tpu_custom_call.1} parent=35 // pred_region
          %s698 = ssub.s32 1664, 1664
          %699 = vsyncadd %s690, %s698
          %s700 = smul.addr %s28, 128
          %s701 = scalar_lea.hbm %s4, %s700
          %s702 = sshll.u32 %s693, 4
          %s703 = int_to_ptr.vmem [resolvable:$true] %s702
          %708 = dma.vmem_to_hbm [thread:$0]  %s703, 1664, %s701, %s690, 128, 256, 8
        $region56: #{tpu_custom_call.1} parent=35 // pred_fallthru
          _
      $region36: #{tpu_custom_call.1} parent=5 // pred_fallthru
        _
      %p709 = scmp.le.s32.totalorder 2, %s19
      // Predicated region
      $region57: #{tpu_custom_call.1} parent=5 // pred_check
        %p710 = pneg %p709
      $region58: #{tpu_custom_call.1} parent=5 // pred_check_branch
        %712 = sbr.rel (%p710) target = $region60
      $region59: #{tpu_custom_call.1} parent=5 // pred_region
        %s713 = ssub.s32 %s19, 2
        // Predicated region
        $region61: #{tpu_custom_call.1} parent=59 // pred_check
          %p714 = pneg %p166
        $region62: #{tpu_custom_call.1} parent=59 // pred_check_branch
          %716 = sbr.rel (%p714) target = $region64
        $region63: #{tpu_custom_call.1} parent=59 // pred_region
          %s717 = sand.u32 %s151, 1
          %s718 = scalar_lea.sflag [#allocation5], %s717
          %s719 = sand.u32 %s151, 1
          %s720 = smul.addr %s719, 104
          %s721 = scalar_lea.vmem [#allocation8], %s720
          %722 = dma.done %s718, 1664
        $region64: #{tpu_custom_call.1} parent=59 // pred_fallthru
          _
      $region60: #{tpu_custom_call.1} parent=5 // pred_fallthru
        _
    $region6: #{tpu_custom_call.1} parent=1 // loop_footer
      %s23 = sadd.s32 1, %s19
    $region7: #{tpu_custom_call.1} parent=1 // loop_footer_branch
      %18 = sbr.rel target = $region3
    $region8: #{tpu_custom_call.1} parent=1 // loop_exit
      _
    %723 = vsyncpa [#allocation4], 1
    %s724 = scalar_lea.sflag [#allocation4], 1
    %725 = vsyncpa %s724, 1
    %726 = vsyncpa [#allocation7], 1
    %s727 = scalar_lea.sflag [#allocation7], 1
    %728 = vsyncpa %s727, 1
    %729 = vsyncpa [#allocation5], 1
    %s730 = scalar_lea.sflag [#allocation5], 1
    %731 = vsyncpa %s730, 1

</llo_original>
